<compile_context>
chip_gen: v6e
topology: v6e:2x2x1
jax: 0.10.0
libtpu: 0.0.40
codegen_flags: <defaults>
</compile_context>

<pallas_src>
import functools

import jax
import jax.numpy as jnp
from jax import lax
from jax.experimental import pallas as pl
from jax.experimental.pallas import tpu as pltpu


def _round_up(x, m):
    return -(-x // m) * m


def _ce_label_smooth_kernel(logits_ref, targets_ref, loss_vec_ref, row_loss_ref, *,
                            num_classes, epsilon, batch_size, block_rows):
    """One batch-tile of the label-smoothed cross entropy.

    logits_ref   : (TB, C) VMEM (any float dtype; upcast to f32 here)
    targets_ref  : (TB, 1) i32 VMEM
    loss_vec_ref : (TB, C) f32 VMEM  (output)
    row_loss_ref : (TB, 1) f32 VMEM  (output: per-row sum of loss_vec)
    """
    i = pl.program_id(0)

    x = logits_ref[...].astype(jnp.float32)            # (TB, C)
    t = targets_ref[...]                                # (TB, 1) int32

    # Numerically stable -log_softmax along the class (lane) axis.
    m = jnp.max(x, axis=1, keepdims=True)
    shifted = x - m
    lse = jnp.log(jnp.sum(jnp.exp(shifted), axis=1, keepdims=True))
    neg_log_probs = lse - shifted                        # == -log_softmax(x)

    # Label smoothing fused into a single select (replaces torch scatter_ + mul/add).
    col = lax.broadcasted_iota(jnp.int32, x.shape, 1)
    on = jnp.float32(1.0 - epsilon + epsilon / num_classes)
    off = jnp.float32(epsilon / num_classes)
    w = jnp.where(col == t, on, off)                     # (TB, C)

    # Mask rows past the true batch size (ragged last grid tile holds undefined
    # bytes).  Select, not multiply, so NaN/Inf garbage cannot leak through.
    row = i * block_rows + lax.broadcasted_iota(jnp.int32, (x.shape[0], 1), 0)
    valid = row < batch_size                             # (TB, 1)
    loss_vec = jnp.where(valid, w * neg_log_probs, 0.0)  # (TB, C)

    loss_vec_ref[...] = loss_vec.astype(loss_vec_ref.dtype)
    # Per-row partial sums; final sum / batch_size happens once in the wrapper.
    row_loss_ref[...] = jnp.sum(loss_vec, axis=1, keepdims=True)


def cross_entropy_loss(logits, targets, num_classes, epsilon=0.1):
    """Pallas equivalent of CrossEntropyLoss(num_classes, epsilon)({'prob': logits}, targets).

    Returns (loss, loss_vec) exactly like the PyTorch module's forward.
    """
    B, C = logits.shape
    assert num_classes == C, "num_classes must match the class dimension of the logits"

    # Tile sizing: rows -> sublanes (multiple of 8), full class axis on lanes.
    # Target ~2 MiB of f32 per tile so per-step overhead (~0.35 us) is amortized.
    target_bytes = 2 * 1024 * 1024
    rows = max(8, target_bytes // (4 * C))
    block_rows = min(_round_up(rows, 8), _round_up(B, 8))
    num_tiles = pl.cdiv(B, block_rows)

    targets2d = targets.astype(jnp.int32).reshape(B, 1)

    # Double-buffered VMEM footprint: logits in (native dtype) + loss_vec out (f32)
    # + tiny targets / row_loss blocks.  Give 2x headroom, clamp to [16, 48] MiB
    # so it fits every generation (v7x physical VMEM is 64 MiB).
    in_bytes = jnp.dtype(logits.dtype).itemsize
    footprint = (2 * block_rows * C * in_bytes
                 + 2 * block_rows * C * 4
                 + 4 * block_rows * 4)
    vmem_limit = int(min(max(2 * footprint, 16 * 1024 * 1024), 48 * 1024 * 1024))

    kernel = functools.partial(
        _ce_label_smooth_kernel,
        num_classes=num_classes,
        epsilon=float(epsilon),
        batch_size=B,
        block_rows=block_rows,
    )

    loss_vec, row_loss = pl.pallas_call(
        kernel,
        grid=(num_tiles,),
        in_specs=[
            pl.BlockSpec((block_rows, C), lambda i: (i, 0)),
            pl.BlockSpec((block_rows, 1), lambda i: (i, 0)),
        ],
        out_specs=[
            pl.BlockSpec((block_rows, C), lambda i: (i, 0)),
            pl.BlockSpec((block_rows, 1), lambda i: (i, 0)),
        ],
        out_shape=(
            jax.ShapeDtypeStruct((B, C), jnp.float32),
            jax.ShapeDtypeStruct((B, 1), jnp.float32),
        ),
        compiler_params=pltpu.CompilerParams(
            # every grid step writes disjoint output blocks -> safe to shard
            # across TensorCores (2x on v7x; neutral on v5e/v6e)
            dimension_semantics=("parallel",),
            vmem_limit_bytes=vmem_limit,
        ),
    )(logits, targets2d)

    # (-targets * log_probs).mean(0).sum() == sum(loss_vec) / B  (single divide).
    loss = jnp.sum(row_loss) / B
    return loss, loss_vec


def _cross_entropy_loss_ref(logits, targets, num_classes, epsilon=0.1):
    """Pure-JAX reference mirroring the PyTorch module (for correctness check)."""
    log_probs = jax.nn.log_softmax(logits.astype(jnp.float32), axis=1)
    one_hot = jax.nn.one_hot(targets, num_classes, dtype=jnp.float32)
    smooth = (1.0 - epsilon) * one_hot + epsilon / num_classes
    loss_vec = -smooth * log_probs
    loss = loss_vec.mean(axis=0).sum()
    return loss, loss_vec


if __name__ == "__main__":
    key = jax.random.PRNGKey(0)
    k1, k2 = jax.random.split(key)
    batch, num_classes = 8, 32
    epsilon = 0.1

    logits = jax.random.normal(k1, (batch, num_classes), dtype=jnp.float32)
    targets = jax.random.randint(k2, (batch,), 0, num_classes, dtype=jnp.int32)

    fn = jax.jit(functools.partial(cross_entropy_loss,
                                   num_classes=num_classes, epsilon=epsilon))
    loss, loss_vec = fn(logits, targets)
    loss = jax.block_until_ready(loss)
    loss_vec = jax.block_until_ready(loss_vec)

    ref_loss, ref_loss_vec = _cross_entropy_loss_ref(logits, targets, num_classes, epsilon)
    assert jnp.allclose(loss, ref_loss, rtol=1e-5, atol=1e-5), (loss, ref_loss)
    assert jnp.allclose(loss_vec, ref_loss_vec, rtol=1e-5, atol=1e-5)
    print("KERNEL_OK")
</pallas_src>

<mosaic_0001>
module attributes {stable_mosaic.version = 11 : i64} {
  func.func @_ce_label_smooth_kernel(%arg0: i32, %arg1: memref<8x32xf32, #tpu.memory_space<vmem>>, %arg2: memref<8x1xi32, #tpu.memory_space<vmem>>, %arg3: memref<8x32xf32, #tpu.memory_space<vmem>>, %arg4: memref<8x1xf32, #tpu.memory_space<vmem>>) attributes {dimension_semantics = [#tpu.dimension_semantics<parallel>], iteration_bounds = array<i64: 1>, scalar_prefetch = 0 : i64, scratch_operands = 0 : i64, tpu.core_type = #tpu.core_type<tc>, window_params = [{transform_indices = @transform_0, window_bounds = array<i64: 8, 32>}, {transform_indices = @transform_1, window_bounds = array<i64: 8, 1>}, {transform_indices = @transform_2, window_bounds = array<i64: 8, 32>}, {transform_indices = @transform_3, window_bounds = array<i64: 8, 1>}]} {
    %c0 = arith.constant 0 : index
    %c0_0 = arith.constant 0 : index
    %0 = vector.load %arg1[%c0, %c0_0] : memref<8x32xf32, #tpu.memory_space<vmem>>, vector<8x32xf32>
    %c0_1 = arith.constant 0 : index
    %c0_2 = arith.constant 0 : index
    %1 = vector.load %arg2[%c0_1, %c0_2] : memref<8x1xi32, #tpu.memory_space<vmem>>, vector<8x1xi32>
    %cst = arith.constant dense<0xFF800000> : vector<8xf32>
    %2 = vector.multi_reduction <maximumf>, %0, %cst [1] : vector<8x32xf32> to vector<8xf32>
    %3 = vector.shape_cast %2 : vector<8xf32> to vector<8x1xf32>
    %4 = vector.broadcast %3 : vector<8x1xf32> to vector<8x32xf32>
    %5 = arith.subf %0, %4 : vector<8x32xf32>
    %6 = math.exp %5 : vector<8x32xf32>
    %cst_3 = arith.constant dense<0.000000e+00> : vector<8xf32>
    %7 = vector.multi_reduction <add>, %6, %cst_3 [1] : vector<8x32xf32> to vector<8xf32>
    %8 = vector.shape_cast %7 : vector<8xf32> to vector<8x1xf32>
    %9 = math.log %8 : vector<8x1xf32>
    %10 = vector.broadcast %9 : vector<8x1xf32> to vector<8x32xf32>
    %11 = arith.subf %10, %5 : vector<8x32xf32>
    %12 = tpu.iota {dimensions = array<i32: 1>} : vector<8x32xi32>
    %13 = vector.broadcast %1 : vector<8x1xi32> to vector<8x32xi32>
    %14 = arith.cmpi eq, %12, %13 : vector<8x32xi32>
    %cst_4 = arith.constant 0.903124988 : f32
    %cst_5 = arith.constant 3.125000e-03 : f32
    %15 = vector.broadcast %cst_4 : f32 to vector<8x32xf32>
    %16 = vector.broadcast %cst_5 : f32 to vector<8x32xf32>
    %17 = arith.select %14, %15, %16 : vector<8x32xi1>, vector<8x32xf32>
    %c8_i32 = arith.constant 8 : i32
    %18 = arith.muli %arg0, %c8_i32 : i32
    %19 = tpu.iota {dimensions = array<i32: 0>} : vector<8x1xi32>
    %20 = vector.broadcast %18 : i32 to vector<8x1xi32>
    %21 = arith.addi %20, %19 : vector<8x1xi32>
    %c8_i32_6 = arith.constant 8 : i32
    %22 = vector.broadcast %c8_i32_6 : i32 to vector<8x1xi32>
    %23 = arith.cmpi slt, %21, %22 : vector<8x1xi32>
    %24 = arith.mulf %17, %11 : vector<8x32xf32>
    %cst_7 = arith.constant 0.000000e+00 : f32
    %25 = vector.shape_cast %23 : vector<8x1xi1> to vector<8x1xi1>
    %26 = vector.broadcast %25 : vector<8x1xi1> to vector<8x32xi1>
    %27 = vector.broadcast %cst_7 : f32 to vector<8x32xf32>
    %28 = arith.select %26, %24, %27 : vector<8x32xi1>, vector<8x32xf32>
    %c0_8 = arith.constant 0 : index
    %c0_9 = arith.constant 0 : index
    %29 = vector.load %arg3[%c0_8, %c0_9] : memref<8x32xf32, #tpu.memory_space<vmem>>, vector<8x32xf32>
    tpu.vector_store %arg3[%c0_8, %c0_9], %28 {strides = array<i32>} : memref<8x32xf32, #tpu.memory_space<vmem>>, vector<8x32xf32>,
    %cst_10 = arith.constant dense<0.000000e+00> : vector<8xf32>
    %30 = vector.multi_reduction <add>, %28, %cst_10 [1] : vector<8x32xf32> to vector<8xf32>
    %31 = vector.shape_cast %30 : vector<8xf32> to vector<8x1xf32>
    %c0_11 = arith.constant 0 : index
    %c0_12 = arith.constant 0 : index
    %32 = vector.load %arg4[%c0_11, %c0_12] : memref<8x1xf32, #tpu.memory_space<vmem>>, vector<8x1xf32>
    tpu.vector_store %arg4[%c0_11, %c0_12], %31 {strides = array<i32>} : memref<8x1xf32, #tpu.memory_space<vmem>>, vector<8x1xf32>,
    return
  }
  func.func @transform_0(%arg0: i32) -> (i32, i32) {
    %c0_i32 = arith.constant 0 : i32
    %c0_i32_0 = arith.constant 0 : i32
    return %arg0, %c0_i32 : i32, i32
  }
  func.func @transform_1(%arg0: i32) -> (i32, i32) {
    %c0_i32 = arith.constant 0 : i32
    %c0_i32_0 = arith.constant 0 : i32
    return %arg0, %c0_i32 : i32, i32
  }
  func.func @transform_2(%arg0: i32) -> (i32, i32) {
    %c0_i32 = arith.constant 0 : i32
    %c0_i32_0 = arith.constant 0 : i32
    return %arg0, %c0_i32 : i32, i32
  }
  func.func @transform_3(%arg0: i32) -> (i32, i32) {
    %c0_i32 = arith.constant 0 : i32
    %c0_i32_0 = arith.constant 0 : i32
    return %arg0, %c0_i32 : i32, i32
  }
}

</mosaic_0001>

<llo_original>
// kernel: cross_entropy_loss.1
$region0: #{cross_entropy_loss.1}
  #allocation0 [shape = 'u32[]', space=smem, size = 0x4, offset = 0x4, fixed_abs, tag = 'smem constant byte address 0x4 - core index']
  #allocation1 [shape = 'u32[144,128]{1,0:T(1,128)}', space=vmem, size = 0x12000, scoped, tag = 'internal scratch']
  %s0 = inlined_call_operand.vmem [shape: f32[8,32], index: 0, kind: input, shape index: {}]
  %s1 = inlined_call_operand.vmem [shape: s32[8,1], index: 1, kind: input, shape index: {}]
  %s2 = inlined_call_operand.hbm [shape: f32[8,32], index: 2, kind: output, shape index: {0}]
  %s3 = inlined_call_operand.vmem [shape: f32[8,1], index: 3, kind: output, shape index: {1}]
  %4 = xla_tuple %s2, %s3
  %s5 = sld [smem:[#allocation0]]
  $region26: #{cross_entropy_loss.1} parent=0
    _
  %s7 = ssub.s32 1, %s5
  %s8 = scalar_select 0, %s7, %s5
  $region1: #{cross_entropy_loss.1} parent=0
    #allocation2 [shape = 'u8[4096]{0}', space=vmem, size = 0x1000, scoped, tag = 'output window, operand 0, single buffered']
    #allocation3 [shape = 's32[1]{0}', space=sflag, size = 0x4, scoped, tag = 'scoped memory for cross_entropy_loss.1']
    %9 = vsyncpa [#allocation3], 0
    // Predicated region
    $region2: #{cross_entropy_loss.1} parent=1 // pred_check
      _
    $region3: #{cross_entropy_loss.1} parent=1 // pred_check_branch
      %11 = sbr.rel (0) target = $region5
    $region4: #{cross_entropy_loss.1} parent=1 // pred_region
      _
    $region5: #{cross_entropy_loss.1} parent=1 // pred_fallthru
      _
    // Predicated region
    $region6: #{cross_entropy_loss.1} parent=1 // pred_check
      _
    $region7: #{cross_entropy_loss.1} parent=1 // pred_check_branch
      %13 = sbr.rel (0) target = $region9
    $region8: #{cross_entropy_loss.1} parent=1 // pred_region
      _
    $region9: #{cross_entropy_loss.1} parent=1 // pred_fallthru
      _
    %v14 = vld [vmem:[%s0] sm:$0xff]
    %v15 = vld [vmem:[%s1] sm:$0xff]
    %vm16 = vcmask 261120
    %v17 = vsel %vm16, %v14, -inf
    %18 = vmax.xlane.f32.xlu0 %v17
    %v19 = vpop.xlane.xlu0 %18
    %v20 = vsub.f32 %v14, %v19
    %v21 = vmul.f32 %v20, 1.442695
    %v22 = vpow.pop %v21
    %v23 = vsel %vm16, %v22, 0.0
    %24 = vadd.xlane.f32.xlu0 %v23
    %v25 = vpop.xlane.xlu0 %24
    %v26 = vlog2.pop %v25
    %v27 = vmul.f32 %v26, 0.6931472
    %v28 = vsub.f32 %v27, %v20
    %v29 = vlaneseq
    %v30 = vand.u32 %v29, 127
    %31 = vset.pattern.permute.xlu0 0
    %32 = vperm.xlu0 %31, %v15
    %v33 = vpop.permute.xlu0 %32
    %vm34 = vcmp.eq.s32.totalorder %v30, %v33
    %v35 = vsel %vm34, 0.903125, 0.003125
    %s36 = smul.u32 0, 8
    %v37 = vlaneseq
    %v38 = vshrl.u32 %v37, 7
    %v39 = vstv %s36
    %v40 = vadd.s32 %v39, %v38
    %vm41 = vcmp.lt.s32.totalorder %v40, 8
    %v42 = vmul.f32 %v35, %v28
    %v43 = vsel %vm41, 1, 0
    %vm44 = vcmp.eq.s32.totalorder %v43, 1
    %v45 = vsel %vm44, %v42, 0.0
    %46 = vst.msk [vmem:[#allocation2] sm:$0xff] %vm16, %v45
    %v47 = vsel %vm16, %v45, 0.0
    %48 = vadd.xlane.f32.xlu0 %v47
    %v49 = vpop.xlane.xlu0 %48
    %vm50 = vcmask 7168
    %51 = vst.msk [vmem:[%s3] sm:$0xff] %vm50, %v49
    // Predicated region
    $region10: #{cross_entropy_loss.1} parent=1 // pred_check
      _
    $region11: #{cross_entropy_loss.1} parent=1 // pred_check_branch
      %53 = sbr.rel (0) target = $region13
    $region12: #{cross_entropy_loss.1} parent=1 // pred_region
      %s55 = ssub.s32 128, 128
      %56 = vsyncadd [#allocation3], %s55
      %s58 = sshll.u32 [#allocation2], 4
      %s59 = int_to_ptr.vmem [resolvable:$true] %s58
      %61 = dma.vmem_to_hbm [thread:$0]  %s59, 128, %s2, [#allocation3]
    $region13: #{cross_entropy_loss.1} parent=1 // pred_fallthru
      _
    // Predicated region
    $region14: #{cross_entropy_loss.1} parent=1 // pred_check
      _
    $region15: #{cross_entropy_loss.1} parent=1 // pred_check_branch
      %63 = sbr.rel (0) target = $region17
    $region16: #{cross_entropy_loss.1} parent=1 // pred_region
      _
    $region17: #{cross_entropy_loss.1} parent=1 // pred_fallthru
      _
    // Predicated region
    $region18: #{cross_entropy_loss.1} parent=1 // pred_check
      _
    $region19: #{cross_entropy_loss.1} parent=1 // pred_check_branch
      %65 = sbr.rel (0) target = $region21
    $region20: #{cross_entropy_loss.1} parent=1 // pred_region
      %66 = dma.done [#allocation3], 128
    $region21: #{cross_entropy_loss.1} parent=1 // pred_fallthru
      _
    // Predicated region
    $region22: #{cross_entropy_loss.1} parent=1 // pred_check
      _
    $region23: #{cross_entropy_loss.1} parent=1 // pred_check_branch
      %68 = sbr.rel (0) target = $region25
    $region24: #{cross_entropy_loss.1} parent=1 // pred_region
      _
    $region25: #{cross_entropy_loss.1} parent=1 // pred_fallthru
      _
    %69 = vsyncpa [#allocation3], 1

</llo_original>
